<compile_context>
chip_gen: v6e
topology: v6e:2x2x1
jax: 0.10.0
libtpu: 0.0.40
codegen_flags: <defaults>
</compile_context>

<pallas_src>
import functools

import jax
import jax.numpy as jnp
from jax.experimental import pallas as pl
from jax.experimental.pallas import tpu as pltpu


# ----------------------------------------------------------------------------
# Parameter-slab layout (static Python ints, shared by packer and kernel).
# Slab shape: [24, 128] f32.
#   cols [0, k_pad)          rows 0:24 : fused [w1 | ws]^T   (transposed weights)
#   cols [k_pad, k_pad+16)   rows 0:8  : w2^T
#   single columns (k_pad+16 ...)      : gamma/beta/head vectors, lane-packed
# ----------------------------------------------------------------------------
def _slab_layout(n_features):
    n_emb = n_features + 1
    k_pad = ((n_emb + 7) // 8) * 8            # contraction dim padded to 8
    base = k_pad + 16
    cols = {
        "w2": k_pad,
        "g24": base + 0, "b24": base + 1,      # fused BN1|BN_shortcut gamma/beta
        "g2": base + 2, "be2": base + 3,
        "go": base + 4, "beo": base + 5,
        "wo": base + 6, "bo": base + 7,
    }
    assert base + 8 <= 128, "parameter slab layout overflows 128 lanes"
    return n_emb, k_pad, cols


def pack_params(p, n_features):
    """Pack all kernel parameters into one lane-dense [24, 128] f32 slab."""
    n_emb, k_pad, cols = _slab_layout(n_features)
    slab = jnp.zeros((24, 128), jnp.float32)

    # Fused first-layer + shortcut weights, transposed: [24, n_emb].
    w_fused = jnp.concatenate([p["w1"], p["ws"]], axis=1)          # [n_emb, 24]
    slab = slab.at[0:24, 0:n_emb].set(w_fused.T)
    slab = slab.at[0:8, cols["w2"]:cols["w2"] + 16].set(p["w2"].T)  # [8, 16]

    # Fused BN1|BN_shortcut gamma/beta (24 rows), then the rest.
    slab = slab.at[0:16, cols["g24"]].set(p["g1"][0])
    slab = slab.at[16:24, cols["g24"]].set(p["gs"][0])
    slab = slab.at[0:16, cols["b24"]].set(p["be1"][0])
    slab = slab.at[16:24, cols["b24"]].set(p["bes"][0])
    slab = slab.at[0:8, cols["g2"]].set(p["g2"][0])
    slab = slab.at[0:8, cols["be2"]].set(p["be2"][0])
    slab = slab.at[0:8, cols["go"]].set(p["go"][0])
    slab = slab.at[0:8, cols["beo"]].set(p["beo"][0])
    slab = slab.at[0:8, cols["wo"]].set(p["wo"][:, 0])
    slab = slab.at[0, cols["bo"]].set(p["bo"][0, 0])
    return slab


# ----------------------------------------------------------------------------
# Pallas kernel: whole forward (fused matmul + fused batchnorms + relu +
# residual add + output head) in batch-on-lanes layout, single invocation.
# ----------------------------------------------------------------------------
def resnet_kernel(din_ref, p_ref, out_ref, *, n_features: int, batch: int,
                  classify: bool):
    _, k_pad, cols = _slab_layout(n_features)
    b_pad = din_ref.shape[1]
    eps = jnp.float32(1e-5)
    inv_n = jnp.float32(1.0 / batch)

    # Static-slice views into the packed parameter slab (layout math only).
    wxT = p_ref[0:24, 0:k_pad]                                     # [24, k_pad]
    w2T = p_ref[0:8, cols["w2"]:cols["w2"] + 16]                   # [8, 16]
    g24 = p_ref[0:24, cols["g24"]:cols["g24"] + 1]                 # [24, 1]
    b24 = p_ref[0:24, cols["b24"]:cols["b24"] + 1]
    g2 = p_ref[0:8, cols["g2"]:cols["g2"] + 1]
    be2 = p_ref[0:8, cols["be2"]:cols["be2"] + 1]
    go = p_ref[0:8, cols["go"]:cols["go"] + 1]
    beo = p_ref[0:8, cols["beo"]:cols["beo"] + 1]
    wo = p_ref[0:8, cols["wo"]:cols["wo"] + 1]
    bo = p_ref[0:1, cols["bo"]:cols["bo"] + 1]

    # Lane-validity mask for the padded batch columns (statically skipped when
    # the batch is already a multiple of 128).
    if batch != b_pad:
        lane = jax.lax.broadcasted_iota(jnp.int32, (1, b_pad), 1)
        mask = (lane < batch).astype(jnp.float32)
    else:
        mask = None

    def bn(h, g, b):
        # Training-mode BatchNorm1d in transposed layout: per-row (feature)
        # stats over the lane (batch) axis.  Inputs keep padded columns at
        # exactly 0, so plain lane sums equal the valid-column sums and
        # var = E[h^2] - mu^2 needs no extra masking.
        mu = jnp.sum(h, axis=1, keepdims=True) * inv_n
        ex2 = jnp.sum(h * h, axis=1, keepdims=True) * inv_n
        var = jnp.maximum(ex2 - mu * mu, 0.0)
        return (h - mu) * jax.lax.rsqrt(var + eps) * g + b

    def relu_masked(h):
        h = jnp.maximum(h, 0.0)
        return h if mask is None else h * mask   # re-zero padded columns

    din = din_ref[...]                                             # [k_pad, B_pad]

    # Fused first-layer + shortcut matmul (one MXU pass): rows 0:16 = layers
    # branch, rows 16:24 = shortcut branch.  Treatment t is already a row of
    # din^T; pre-BN linear biases are dropped (exact cancellation under BN).
    h24 = jnp.dot(wxT, din, preferred_element_type=jnp.float32)    # [24, B_pad]

    # One fused BN over all 24 rows (exactly BN1 + BN_shortcut), ReLU, re-mask.
    h24 = relu_masked(bn(h24, g24, b24))

    # layers branch: Linear(16, 8) + BN + ReLU.
    h2 = jnp.dot(w2T, h24[0:16, :], preferred_element_type=jnp.float32)  # [8, B_pad]
    dout = relu_masked(bn(h2, g2, be2))

    # Residual add + output BN + 8->1 head (broadcast-mul + sublane reduce,
    # no 1-wide MXU pass).
    d = bn(dout + h24[16:24, :], go, beo)                          # [8, B_pad]
    y = jnp.sum(d * wo, axis=0, keepdims=True) + bo                # [1, B_pad]

    if classify:
        y = jax.nn.sigmoid(y)

    out_ref[...] = y.astype(out_ref.dtype)                         # lane-dense store


# ----------------------------------------------------------------------------
# Wrapper: layout plumbing + pallas_call.  Two input DMAs: din^T and the slab.
# ----------------------------------------------------------------------------
def resnet_forward(x, t, param_slab, *, n_features: int, classify: bool):
    B = x.shape[0]
    _, k_pad, _ = _slab_layout(n_features)
    b_pad = ((B + 127) // 128) * 128

    # Batch-on-lanes input: din^T = [x | t]^T, zero-padded to [k_pad, B_pad].
    din_t = jnp.zeros((k_pad, b_pad), jnp.float32)
    din_t = din_t.at[0:n_features, 0:B].set(x.astype(jnp.float32).T)
    din_t = din_t.at[n_features, 0:B].set(t.astype(jnp.float32).reshape(-1))

    kernel = functools.partial(
        resnet_kernel, n_features=n_features, batch=B, classify=classify)

    y = pl.pallas_call(
        kernel,
        out_shape=jax.ShapeDtypeStruct((1, b_pad), jnp.float32),
        in_specs=[pl.BlockSpec(memory_space=pltpu.MemorySpace.VMEM)] * 2,
        out_specs=pl.BlockSpec(memory_space=pltpu.MemorySpace.VMEM),
        compiler_params=pltpu.CompilerParams(
            # Above the 16 MiB (v5e) / 32 MiB (v6e, v7x) scoped defaults and
            # below v7x's 64 MiB physical VMEM, so one block works everywhere.
            vmem_limit_bytes=48 * 1024 * 1024,
        ),
    )(din_t, param_slab)

    return y[0, 0:B].reshape(B, 1)


# ----------------------------------------------------------------------------
# Deterministic parameter initialization (shapes from Resnet.__init__).
# PyTorch Linear(in, out) weight [out, in] is stored pre-transposed as [in, out].
# Biases b1/b2/bs are kept for the reference (PyTorch semantics) but are NOT
# packed into the kernel slab — they cancel exactly under training-mode BN.
# ----------------------------------------------------------------------------
def init_params(key, n_emb):
    ks = jax.random.split(key, 4)

    def lin(k, fan_in, fan_out):
        kw, kb = jax.random.split(k)
        bound = 1.0 / jnp.sqrt(jnp.float32(fan_in))
        w = jax.random.uniform(kw, (fan_in, fan_out), jnp.float32, -bound, bound)
        b = jax.random.uniform(kb, (1, fan_out), jnp.float32, -bound, bound)
        return w, b

    w1, b1 = lin(ks[0], n_emb, 16)
    w2, b2 = lin(ks[1], 16, 8)
    ws, bs = lin(ks[2], n_emb, 8)
    wo, bo = lin(ks[3], 8, 1)

    ones = lambda n: jnp.ones((1, n), jnp.float32)
    zeros = lambda n: jnp.zeros((1, n), jnp.float32)

    return {
        "w1": w1, "b1": b1, "g1": ones(16), "be1": zeros(16),
        "w2": w2, "b2": b2, "g2": ones(8), "be2": zeros(8),
        "ws": ws, "bs": bs, "gs": ones(8), "bes": zeros(8),
        "go": ones(8), "beo": zeros(8),
        "wo": wo, "bo": bo,
    }


# ----------------------------------------------------------------------------
# Pure-JAX reference (follows the PyTorch module exactly, biases included).
# ----------------------------------------------------------------------------
def resnet_ref(x, t, p, *, classify):
    din = jnp.concatenate([x, t], axis=-1).astype(jnp.float32)
    eps = 1e-5

    def bn(h, g, b):
        mu = jnp.mean(h, axis=0, keepdims=True)
        var = jnp.mean((h - mu) ** 2, axis=0, keepdims=True)
        return (h - mu) / jnp.sqrt(var + eps) * g + b

    h = jnp.maximum(bn(din @ p["w1"] + p["b1"], p["g1"], p["be1"]), 0.0)
    dout = jnp.maximum(bn(h @ p["w2"] + p["b2"], p["g2"], p["be2"]), 0.0)
    sc = jnp.maximum(bn(din @ p["ws"] + p["bs"], p["gs"], p["bes"]), 0.0)
    d = bn(dout + sc, p["go"], p["beo"])
    y = d @ p["wo"] + p["bo"]
    return jax.nn.sigmoid(y) if classify else y


if __name__ == "__main__":
    # args.n_features = 4  →  n_embedding = n_features + 1 = 5
    # args.classify = 1    →  sigmoid head
    batch = 8
    n_features = 4
    n_emb = n_features + 1
    classify = True

    key = jax.random.PRNGKey(0)
    kx, kt, kp = jax.random.split(key, 3)

    x = jax.random.normal(kx, (batch, n_features), jnp.float32)          # data.x
    t = (jax.random.uniform(kt, (batch, 1)) > 0.5).astype(jnp.float32)   # data.t

    params = init_params(kp, n_emb)
    slab = pack_params(params, n_features)   # one-time host-side packing

    out = resnet_forward(x, t, slab, n_features=n_features, classify=classify)
    out = jax.block_until_ready(out)

    ref = resnet_ref(x, t, params, classify=classify)
    assert out.shape == (batch, 1), out.shape
    # Small fp differences expected from the exact-in-math bias cancellation,
    # E[x^2]-mu^2 variance form, and rsqrt vs /sqrt; 1e-4 is still tight for a
    # sigmoid output in (0, 1).
    assert jnp.allclose(out, ref, atol=1e-4, rtol=1e-4), (out, ref)

    print("KERNEL_OK")
</pallas_src>

<mosaic_0001>
module attributes {stable_mosaic.version = 11 : i64} {
  func.func @resnet_kernel(%arg0: memref<8x128xf32, #tpu.memory_space<vmem>>, %arg1: memref<24x128xf32, #tpu.memory_space<vmem>>, %arg2: memref<1x128xf32, #tpu.memory_space<vmem>>) attributes {dimension_semantics = [], scalar_prefetch = 0 : i64, scratch_operands = 0 : i64, tpu.core_type = #tpu.core_type<tc>} {
    %c0 = arith.constant 0 : index
    %c0_0 = arith.constant 0 : index
    %0 = vector.load %arg1[%c0, %c0_0] : memref<24x128xf32, #tpu.memory_space<vmem>>, vector<24x8xf32>
    %c0_1 = arith.constant 0 : index
    %c8 = arith.constant 8 : index
    %1 = vector.load %arg1[%c0_1, %c8] : memref<24x128xf32, #tpu.memory_space<vmem>>, vector<8x16xf32>
    %c0_2 = arith.constant 0 : index
    %c24 = arith.constant 24 : index
    %2 = vector.load %arg1[%c0_2, %c24] : memref<24x128xf32, #tpu.memory_space<vmem>>, vector<24x1xf32>
    %c0_3 = arith.constant 0 : index
    %c25 = arith.constant 25 : index
    %3 = vector.load %arg1[%c0_3, %c25] : memref<24x128xf32, #tpu.memory_space<vmem>>, vector<24x1xf32>
    %c0_4 = arith.constant 0 : index
    %c26 = arith.constant 26 : index
    %4 = vector.load %arg1[%c0_4, %c26] : memref<24x128xf32, #tpu.memory_space<vmem>>, vector<8x1xf32>
    %c0_5 = arith.constant 0 : index
    %c27 = arith.constant 27 : index
    %5 = vector.load %arg1[%c0_5, %c27] : memref<24x128xf32, #tpu.memory_space<vmem>>, vector<8x1xf32>
    %c0_6 = arith.constant 0 : index
    %c28 = arith.constant 28 : index
    %6 = vector.load %arg1[%c0_6, %c28] : memref<24x128xf32, #tpu.memory_space<vmem>>, vector<8x1xf32>
    %c0_7 = arith.constant 0 : index
    %c29 = arith.constant 29 : index
    %7 = vector.load %arg1[%c0_7, %c29] : memref<24x128xf32, #tpu.memory_space<vmem>>, vector<8x1xf32>
    %c0_8 = arith.constant 0 : index
    %c30 = arith.constant 30 : index
    %8 = vector.load %arg1[%c0_8, %c30] : memref<24x128xf32, #tpu.memory_space<vmem>>, vector<8x1xf32>
    %c0_9 = arith.constant 0 : index
    %c31 = arith.constant 31 : index
    %9 = vector.load %arg1[%c0_9, %c31] : memref<24x128xf32, #tpu.memory_space<vmem>>, vector<1x1xf32>
    %10 = tpu.iota {dimensions = array<i32: 1>} : vector<1x128xi32>
    %c8_i32 = arith.constant 8 : i32
    %11 = vector.broadcast %c8_i32 : i32 to vector<1x128xi32>
    %12 = arith.cmpi slt, %10, %11 : vector<1x128xi32>
    %13 = arith.extui %12 : vector<1x128xi1> to vector<1x128xi32>
    %14 = arith.sitofp %13 : vector<1x128xi32> to vector<1x128xf32>
    %c0_10 = arith.constant 0 : index
    %c0_11 = arith.constant 0 : index
    %15 = vector.load %arg0[%c0_10, %c0_11] : memref<8x128xf32, #tpu.memory_space<vmem>>, vector<8x128xf32>
    %cst = arith.constant dense<0.000000e+00> : vector<24x128xf32>
    %16 = tpu.matmul %0, %15, %cst {dimension_numbers = #tpu.dot_dimension_numbers<[1], [0], [0], [1], [0, 0, 1, 1], [], []>} : vector<24x8xf32>, vector<8x128xf32>, vector<24x128xf32> -> vector<24x128xf32>
    %cst_12 = arith.constant dense<0.000000e+00> : vector<24xf32>
    %17 = vector.multi_reduction <add>, %16, %cst_12 [1] : vector<24x128xf32> to vector<24xf32>
    %18 = vector.shape_cast %17 : vector<24xf32> to vector<24x1xf32>
    %cst_13 = arith.constant 1.250000e-01 : f32
    %19 = vector.broadcast %cst_13 : f32 to vector<24x1xf32>
    %20 = arith.mulf %18, %19 : vector<24x1xf32>
    %21 = arith.mulf %16, %16 : vector<24x128xf32>
    %cst_14 = arith.constant dense<0.000000e+00> : vector<24xf32>
    %22 = vector.multi_reduction <add>, %21, %cst_14 [1] : vector<24x128xf32> to vector<24xf32>
    %23 = vector.shape_cast %22 : vector<24xf32> to vector<24x1xf32>
    %cst_15 = arith.constant 1.250000e-01 : f32
    %24 = vector.broadcast %cst_15 : f32 to vector<24x1xf32>
    %25 = arith.mulf %23, %24 : vector<24x1xf32>
    %26 = arith.mulf %20, %20 : vector<24x1xf32>
    %27 = arith.subf %25, %26 : vector<24x1xf32>
    %cst_16 = arith.constant 0.000000e+00 : f32
    %28 = vector.broadcast %cst_16 : f32 to vector<24x1xf32>
    %29 = arith.maximumf %27, %28 : vector<24x1xf32>
    %30 = vector.broadcast %20 : vector<24x1xf32> to vector<24x128xf32>
    %31 = arith.subf %16, %30 : vector<24x128xf32>
    %cst_17 = arith.constant 9.99999974E-6 : f32
    %32 = vector.broadcast %cst_17 : f32 to vector<24x1xf32>
    %33 = arith.addf %29, %32 : vector<24x1xf32>
    %34 = math.rsqrt %33 : vector<24x1xf32>
    %35 = vector.broadcast %34 : vector<24x1xf32> to vector<24x128xf32>
    %36 = arith.mulf %31, %35 : vector<24x128xf32>
    %37 = vector.broadcast %2 : vector<24x1xf32> to vector<24x128xf32>
    %38 = arith.mulf %36, %37 : vector<24x128xf32>
    %39 = vector.broadcast %3 : vector<24x1xf32> to vector<24x128xf32>
    %40 = arith.addf %38, %39 : vector<24x128xf32>
    %cst_18 = arith.constant 0.000000e+00 : f32
    %41 = vector.broadcast %cst_18 : f32 to vector<24x128xf32>
    %42 = arith.maximumf %40, %41 : vector<24x128xf32>
    %43 = vector.broadcast %14 : vector<1x128xf32> to vector<24x128xf32>
    %44 = arith.mulf %42, %43 : vector<24x128xf32>
    %45 = vector.extract_strided_slice %44 {offsets = [0, 0], sizes = [16, 128], strides = [1, 1]} : vector<24x128xf32> to vector<16x128xf32>
    %cst_19 = arith.constant dense<0.000000e+00> : vector<8x128xf32>
    %46 = tpu.matmul %1, %45, %cst_19 {dimension_numbers = #tpu.dot_dimension_numbers<[1], [0], [0], [1], [0, 0, 1, 1], [], []>} : vector<8x16xf32>, vector<16x128xf32>, vector<8x128xf32> -> vector<8x128xf32>
    %cst_20 = arith.constant dense<0.000000e+00> : vector<8xf32>
    %47 = vector.multi_reduction <add>, %46, %cst_20 [1] : vector<8x128xf32> to vector<8xf32>
    %48 = vector.shape_cast %47 : vector<8xf32> to vector<8x1xf32>
    %cst_21 = arith.constant 1.250000e-01 : f32
    %49 = vector.broadcast %cst_21 : f32 to vector<8x1xf32>
    %50 = arith.mulf %48, %49 : vector<8x1xf32>
    %51 = arith.mulf %46, %46 : vector<8x128xf32>
    %cst_22 = arith.constant dense<0.000000e+00> : vector<8xf32>
    %52 = vector.multi_reduction <add>, %51, %cst_22 [1] : vector<8x128xf32> to vector<8xf32>
    %53 = vector.shape_cast %52 : vector<8xf32> to vector<8x1xf32>
    %cst_23 = arith.constant 1.250000e-01 : f32
    %54 = vector.broadcast %cst_23 : f32 to vector<8x1xf32>
    %55 = arith.mulf %53, %54 : vector<8x1xf32>
    %56 = arith.mulf %50, %50 : vector<8x1xf32>
    %57 = arith.subf %55, %56 : vector<8x1xf32>
    %cst_24 = arith.constant 0.000000e+00 : f32
    %58 = vector.broadcast %cst_24 : f32 to vector<8x1xf32>
    %59 = arith.maximumf %57, %58 : vector<8x1xf32>
    %60 = vector.broadcast %50 : vector<8x1xf32> to vector<8x128xf32>
    %61 = arith.subf %46, %60 : vector<8x128xf32>
    %cst_25 = arith.constant 9.99999974E-6 : f32
    %62 = vector.broadcast %cst_25 : f32 to vector<8x1xf32>
    %63 = arith.addf %59, %62 : vector<8x1xf32>
    %64 = math.rsqrt %63 : vector<8x1xf32>
    %65 = vector.broadcast %64 : vector<8x1xf32> to vector<8x128xf32>
    %66 = arith.mulf %61, %65 : vector<8x128xf32>
    %67 = vector.broadcast %4 : vector<8x1xf32> to vector<8x128xf32>
    %68 = arith.mulf %66, %67 : vector<8x128xf32>
    %69 = vector.broadcast %5 : vector<8x1xf32> to vector<8x128xf32>
    %70 = arith.addf %68, %69 : vector<8x128xf32>
    %cst_26 = arith.constant 0.000000e+00 : f32
    %71 = vector.broadcast %cst_26 : f32 to vector<8x128xf32>
    %72 = arith.maximumf %70, %71 : vector<8x128xf32>
    %73 = vector.broadcast %14 : vector<1x128xf32> to vector<8x128xf32>
    %74 = arith.mulf %72, %73 : vector<8x128xf32>
    %75 = vector.extract_strided_slice %44 {offsets = [16, 0], sizes = [8, 128], strides = [1, 1]} : vector<24x128xf32> to vector<8x128xf32>
    %76 = arith.addf %74, %75 : vector<8x128xf32>
    %cst_27 = arith.constant dense<0.000000e+00> : vector<8xf32>
    %77 = vector.multi_reduction <add>, %76, %cst_27 [1] : vector<8x128xf32> to vector<8xf32>
    %78 = vector.shape_cast %77 : vector<8xf32> to vector<8x1xf32>
    %cst_28 = arith.constant 1.250000e-01 : f32
    %79 = vector.broadcast %cst_28 : f32 to vector<8x1xf32>
    %80 = arith.mulf %78, %79 : vector<8x1xf32>
    %81 = arith.mulf %76, %76 : vector<8x128xf32>
    %cst_29 = arith.constant dense<0.000000e+00> : vector<8xf32>
    %82 = vector.multi_reduction <add>, %81, %cst_29 [1] : vector<8x128xf32> to vector<8xf32>
    %83 = vector.shape_cast %82 : vector<8xf32> to vector<8x1xf32>
    %cst_30 = arith.constant 1.250000e-01 : f32
    %84 = vector.broadcast %cst_30 : f32 to vector<8x1xf32>
    %85 = arith.mulf %83, %84 : vector<8x1xf32>
    %86 = arith.mulf %80, %80 : vector<8x1xf32>
    %87 = arith.subf %85, %86 : vector<8x1xf32>
    %cst_31 = arith.constant 0.000000e+00 : f32
    %88 = vector.broadcast %cst_31 : f32 to vector<8x1xf32>
    %89 = arith.maximumf %87, %88 : vector<8x1xf32>
    %90 = vector.broadcast %80 : vector<8x1xf32> to vector<8x128xf32>
    %91 = arith.subf %76, %90 : vector<8x128xf32>
    %cst_32 = arith.constant 9.99999974E-6 : f32
    %92 = vector.broadcast %cst_32 : f32 to vector<8x1xf32>
    %93 = arith.addf %89, %92 : vector<8x1xf32>
    %94 = math.rsqrt %93 : vector<8x1xf32>
    %95 = vector.broadcast %94 : vector<8x1xf32> to vector<8x128xf32>
    %96 = arith.mulf %91, %95 : vector<8x128xf32>
    %97 = vector.broadcast %6 : vector<8x1xf32> to vector<8x128xf32>
    %98 = arith.mulf %96, %97 : vector<8x128xf32>
    %99 = vector.broadcast %7 : vector<8x1xf32> to vector<8x128xf32>
    %100 = arith.addf %98, %99 : vector<8x128xf32>
    %101 = vector.broadcast %8 : vector<8x1xf32> to vector<8x128xf32>
    %102 = arith.mulf %100, %101 : vector<8x128xf32>
    %cst_33 = arith.constant dense<0.000000e+00> : vector<128xf32>
    %103 = vector.multi_reduction <add>, %102, %cst_33 [0] : vector<8x128xf32> to vector<128xf32>
    %104 = vector.shape_cast %103 : vector<128xf32> to vector<1x128xf32>
    %105 = vector.broadcast %9 : vector<1x1xf32> to vector<1x128xf32>
    %106 = arith.addf %104, %105 : vector<1x128xf32>
    %107 = arith.negf %106 : vector<1x128xf32>
    %108 = math.exp %107 : vector<1x128xf32>
    %cst_34 = arith.constant 1.000000e+00 : f32
    %109 = vector.broadcast %cst_34 : f32 to vector<1x128xf32>
    %110 = arith.addf %109, %108 : vector<1x128xf32>
    %111 = arith.divf %109, %110 : vector<1x128xf32>
    %c0_35 = arith.constant 0 : index
    %c0_36 = arith.constant 0 : index
    %112 = vector.load %arg2[%c0_35, %c0_36] : memref<1x128xf32, #tpu.memory_space<vmem>>, vector<1x128xf32>
    tpu.vector_store %arg2[%c0_35, %c0_36], %111 {strides = array<i32>} : memref<1x128xf32, #tpu.memory_space<vmem>>, vector<1x128xf32>,
    return
  }
}

</mosaic_0001>

<llo_original>
// kernel: tpu_custom_call.1
$region0: #{tpu_custom_call.1}
  #allocation0 [shape = 'u32[]', space=smem, size = 0x4, offset = 0x4, fixed_abs, tag = 'smem constant byte address 0x4 - core index']
  #allocation1 [shape = 'u32[144,128]{1,0:T(1,128)}', space=vmem, size = 0x12000, scoped, tag = 'internal scratch']
  %s0 = inlined_call_operand.hbm [shape: f32[8,128], index: 0, kind: input, shape index: {}]
  %s1 = inlined_call_operand.hbm [shape: f32[24,128], index: 1, kind: input, shape index: {}]
  %s2 = inlined_call_operand.hbm [shape: f32[1,128], index: 2, kind: output, shape index: {}]
  %s3 = sld [smem:[#allocation0]]
  $region26: #{tpu_custom_call.1} parent=0
    _
  %s5 = ssub.s32 1, %s3
  %s6 = scalar_select 0, %s5, %s3
  $region1: #{tpu_custom_call.1} parent=0
    #allocation2 [shape = 'u8[4096]{0}', space=vmem, size = 0x1000, scoped, tag = 'input window, operand 0, single buffered']
    #allocation3 [shape = 's32[1]{0}', space=sflag, size = 0x4, scoped, tag = 'scoped memory for tpu_custom_call.1']
    #allocation4 [shape = 's32[1]{0}', space=sflag, size = 0x4, scoped, tag = 'scoped memory for tpu_custom_call.1']
    #allocation5 [shape = 'u8[12288]{0}', space=vmem, size = 0x3000, scoped, tag = 'input window, operand 1, single buffered']
    #allocation6 [shape = 's32[1]{0}', space=sflag, size = 0x4, scoped, tag = 'scoped memory for tpu_custom_call.1']
    #allocation7 [shape = 'u8[512]{0}', space=vmem, size = 0x400, scoped, tag = 'output window, operand 0, single buffered']
    %7 = vsyncpa [#allocation3], 0
    %8 = vsyncpa [#allocation6], 0
    %9 = vsyncpa [#allocation4], 0
    // Predicated region
    $region2: #{tpu_custom_call.1} parent=1 // pred_check
      _
    $region3: #{tpu_custom_call.1} parent=1 // pred_check_branch
      %11 = sbr.rel (0) target = $region5
    $region4: #{tpu_custom_call.1} parent=1 // pred_region
      %s13 = ssub.s32 128, 128
      %14 = vsyncadd [#allocation3], %s13
      %s16 = sshll.u32 [#allocation2], 4
      %s17 = int_to_ptr.vmem [resolvable:$true] %s16
      %19 = dma.hbm_to_vmem [thread:$0]  %s0, 128, %s17, [#allocation3]
    $region5: #{tpu_custom_call.1} parent=1 // pred_fallthru
      _
    // Predicated region
    $region6: #{tpu_custom_call.1} parent=1 // pred_check
      _
    $region7: #{tpu_custom_call.1} parent=1 // pred_check_branch
      %21 = sbr.rel (0) target = $region9
    $region8: #{tpu_custom_call.1} parent=1 // pred_region
      %s23 = ssub.s32 384, 384
      %24 = vsyncadd [#allocation6], %s23
      %s25 = sshll.u32 [#allocation5], 4
      %s26 = int_to_ptr.vmem [resolvable:$true] %s25
      %31 = dma.hbm_to_vmem [thread:$0]  %s1, 384, %s26, [#allocation6], 128, 128, 8
    $region9: #{tpu_custom_call.1} parent=1 // pred_fallthru
      _
    // Predicated region
    $region10: #{tpu_custom_call.1} parent=1 // pred_check
      _
    $region11: #{tpu_custom_call.1} parent=1 // pred_check_branch
      %33 = sbr.rel (0) target = $region13
    $region12: #{tpu_custom_call.1} parent=1 // pred_region
      %34 = dma.done [#allocation3], 128
    $region13: #{tpu_custom_call.1} parent=1 // pred_fallthru
      _
    // Predicated region
    $region14: #{tpu_custom_call.1} parent=1 // pred_check
      _
    $region15: #{tpu_custom_call.1} parent=1 // pred_check_branch
      %36 = sbr.rel (0) target = $region17
    $region16: #{tpu_custom_call.1} parent=1 // pred_region
      %37 = dma.done [#allocation6], 384
    $region17: #{tpu_custom_call.1} parent=1 // pred_fallthru
      _
    %v38 = vld [vmem:[#allocation5] sm:$0xff]
    %v39 = vld [vmem:[#allocation5 + $0x8] sm:$0xff]
    %v40 = vld [vmem:[#allocation5 + $0x10] sm:$0xff]
    %v41 = vld [vmem:[#allocation5] sm:$0xff]
    %v42 = vld [vmem:[#allocation5] sm:$0x1]
    %v43 = vlaneseq
    %v44 = vand.u32 %v43, 127
    %vm45 = vcmp.lt.s32.totalorder %v44, 8
    %v46 = vsel %vm45, 1, 0
    %v47 = vcvt.s32.f32 %v46
    %v48 = vld [vmem:[#allocation2] sm:$0xff]
    %vm49 = vcmask 64512
    %v51 = vsel %vm49, %v38, 0
    %v54 = vsel %vm49, %v39, 0
    %v57 = vsel %vm49, %v40, 0
    %59 = vmatprep.subr.mxu0 0.0
    %60 = vmatpush1.msra.mxu0 0.0
    %61 = vmatprep.subr.mxu0 0.0
    %62 = vmatpush1.msra.mxu0 0.0
    %63 = vmatprep.subr.mxu0 0.0
    %64 = vmatpush1.msra.mxu0 0.0
    %65 = vmatprep.subr.mxu0 0.0
    %66 = vmatpush1.msra.mxu0 0.0
    %67 = vmatprep.subr.mxu0 0.0
    %68 = vmatpush1.msra.mxu0 0.0
    %69 = vmatprep.subr.mxu0 0.0
    %70 = vmatpush1.msra.mxu0 0.0
    %71 = vmatprep.subr.mxu0 0.0
    %72 = vmatpush1.msra.mxu0 0.0
    %73 = vmatprep.subr.mxu0 0.0
    %74 = vmatpush1.msra.mxu0 0.0
    %75 = vmatprep.subr.mxu0 0.0
    %76 = vmatpush1.msra.mxu0 0.0
    %77 = vmatprep.subr.mxu0 0.0
    %78 = vmatpush1.msra.mxu0 0.0
    %79 = vmatprep.subr.mxu0 0.0
    %80 = vmatpush1.msra.mxu0 0.0
    %81 = vmatprep.subr.mxu0 0.0
    %82 = vmatpush1.msra.mxu0 0.0
    %83 = vmatprep.subr.mxu0 0.0
    %84 = vmatpush1.msra.mxu0 0.0
    %85 = vmatprep.subr.mxu0 0.0
    %86 = vmatpush1.msra.mxu0 0.0
    %87 = vmatprep.subr.mxu0 0.0
    %88 = vmatpush1.msra.mxu0 0.0
    %89 = vmatprep.subr.mxu0 0.0
    %90 = vmatpush1.msra.mxu0 %v48
    %91 = vmatprep.subr.mxu0 0.0
    %92 = vmatpush2.msra.mxu0 0.0
    %93 = vmatprep.subr.mxu0 0.0
    %94 = vmatpush2.msra.mxu0 0.0
    %95 = vmatprep.subr.mxu0 0.0
    %96 = vmatpush2.msra.mxu0 0.0
    %97 = vmatprep.subr.mxu0 0.0
    %98 = vmatpush2.msra.mxu0 0.0
    %99 = vmatprep.subr.mxu0 0.0
    %100 = vmatpush2.msra.mxu0 0.0
    %101 = vmatprep.subr.mxu0 0.0
    %102 = vmatpush2.msra.mxu0 0.0
    %103 = vmatprep.subr.mxu0 0.0
    %104 = vmatpush2.msra.mxu0 0.0
    %105 = vmatprep.subr.mxu0 0.0
    %106 = vmatpush2.msra.mxu0 0.0
    %107 = vmatprep.subr.mxu0 0.0
    %108 = vmatpush2.msra.mxu0 0.0
    %109 = vmatprep.subr.mxu0 0.0
    %110 = vmatpush2.msra.mxu0 0.0
    %111 = vmatprep.subr.mxu0 0.0
    %112 = vmatpush2.msra.mxu0 0.0
    %113 = vmatprep.subr.mxu0 0.0
    %114 = vmatpush2.msra.mxu0 0.0
    %115 = vmatprep.subr.mxu0 0.0
    %116 = vmatpush2.msra.mxu0 0.0
    %117 = vmatprep.subr.mxu0 0.0
    %118 = vmatpush2.msra.mxu0 0.0
    %119 = vmatprep.subr.mxu0 0.0
    %120 = vmatpush2.msra.mxu0 0.0
    %121 = vmatprep.subr.mxu0 0.0
    %122 = vmatpush2.msra.mxu0 0.0
    %123 = vmatprep.mubr.f32.mxu0 0.0
    %124 = vmatmul.mubr.f32.gmra.mxu0 %v51
    %v125 = vpop.f32.mrf.mxu0
    %v126 = vadd.f32 0.0, %v125
    %v127 = vpop.f32.mrf.mxu0
    %128 = vmatprep.mubr.f32.mxu0 0.0
    %129 = vmatmul.mubr.f32.gmra.mxu0 %v54
    %v130 = vpop.f32.mrf.mxu0
    %v131 = vadd.f32 0.0, %v130
    %v132 = vpop.f32.mrf.mxu0
    %133 = vmatprep.mubr.f32.mxu0 0.0
    %134 = vmatmul.mubr.f32.gmra.mxu0 %v57
    %v135 = vpop.f32.mrf.mxu0
    %v136 = vadd.f32 0.0, %v135
    %v137 = vpop.f32.mrf.mxu0
    %138 = vdwg.mxu0
    %139 = vadd.xlane.f32.xlu0 %v126
    %v140 = vpop.xlane.xlu0 %139
    %141 = vadd.xlane.f32.xlu0 %v131
    %v142 = vpop.xlane.xlu0 %141
    %143 = vadd.xlane.f32.xlu0 %v136
    %v144 = vpop.xlane.xlu0 %143
    %v145 = vmul.f32 %v140, 0.125
    %v146 = vmul.f32 %v142, 0.125
    %v147 = vmul.f32 %v144, 0.125
    %v148 = vmul.f32 %v126, %v126
    %v149 = vmul.f32 %v131, %v131
    %v150 = vmul.f32 %v136, %v136
    %151 = vadd.xlane.f32.xlu0 %v148
    %v152 = vpop.xlane.xlu0 %151
    %153 = vadd.xlane.f32.xlu0 %v149
    %v154 = vpop.xlane.xlu0 %153
    %155 = vadd.xlane.f32.xlu0 %v150
    %v156 = vpop.xlane.xlu0 %155
    %v157 = vmul.f32 %v152, 0.125
    %v158 = vmul.f32 %v154, 0.125
    %v159 = vmul.f32 %v156, 0.125
    %v160 = vmul.f32 %v145, %v145
    %v161 = vmul.f32 %v146, %v146
    %v162 = vmul.f32 %v147, %v147
    %v163 = vsub.f32 %v157, %v160
    %v164 = vsub.f32 %v158, %v161
    %v165 = vsub.f32 %v159, %v162
    %v166 = vmax.f32 %v163, 0.0
    %v167 = vmax.f32 %v164, 0.0
    %v168 = vmax.f32 %v165, 0.0
    %v169 = vsub.f32 %v126, %v145
    %v170 = vsub.f32 %v131, %v146
    %v171 = vsub.f32 %v136, %v147
    %v172 = vadd.f32 %v166, 1e-05
    %v173 = vadd.f32 %v167, 1e-05
    %v174 = vadd.f32 %v168, 1e-05
    %v175 = vrsqrt.pop %v172
    %v176 = vrsqrt.pop %v173
    %v177 = vrsqrt.pop %v174
    %v178 = vmul.f32 %v169, %v175
    %v179 = vmul.f32 %v170, %v176
    %v180 = vmul.f32 %v171, %v177
    %181 = vset.pattern.permute.xlu0 24
    %182 = vperm.xlu0 %181, %v38
    %v183 = vpop.permute.xlu0 %182
    %185 = vset.pattern.permute.xlu0 24
    %186 = vperm.xlu0 %185, %v39
    %v187 = vpop.permute.xlu0 %186
    %189 = vset.pattern.permute.xlu0 24
    %190 = vperm.xlu0 %189, %v40
    %v191 = vpop.permute.xlu0 %190
    %v193 = vmul.f32 %v178, %v183
    %v194 = vmul.f32 %v179, %v187
    %v195 = vmul.f32 %v180, %v191
    %196 = vset.pattern.permute.xlu0 25
    %197 = vperm.xlu0 %196, %v38
    %v198 = vpop.permute.xlu0 %197
    %200 = vset.pattern.permute.xlu0 25
    %201 = vperm.xlu0 %200, %v39
    %v202 = vpop.permute.xlu0 %201
    %204 = vset.pattern.permute.xlu0 25
    %205 = vperm.xlu0 %204, %v40
    %v206 = vpop.permute.xlu0 %205
    %v208 = vadd.f32 %v193, %v198
    %v209 = vadd.f32 %v194, %v202
    %v210 = vadd.f32 %v195, %v206
    %v211 = vmax.f32 %v208, 0.0
    %v212 = vmax.f32 %v209, 0.0
    %v213 = vmax.f32 %v210, 0.0
    %v214 = vmul.f32 %v211, %v47
    %v215 = vmul.f32 %v212, %v47
    %v216 = vmul.f32 %v213, %v47
    %218 = vrot.lane.b32.xlu0 %v41, 120
    %v219 = vpop.permute.xlu0 %218
    %vm220 = vcmask 130048
    %v221 = vsel %vm220, %v219, 0
    %223 = vmatprep.subr.mxu0 0.0
    %224 = vmatpush1.msra.mxu0 0.0
    %225 = vmatprep.subr.mxu0 0.0
    %226 = vmatpush1.msra.mxu0 0.0
    %227 = vmatprep.subr.mxu0 0.0
    %228 = vmatpush1.msra.mxu0 0.0
    %229 = vmatprep.subr.mxu0 0.0
    %230 = vmatpush1.msra.mxu0 0.0
    %231 = vmatprep.subr.mxu0 0.0
    %232 = vmatpush1.msra.mxu0 0.0
    %233 = vmatprep.subr.mxu0 0.0
    %234 = vmatpush1.msra.mxu0 0.0
    %235 = vmatprep.subr.mxu0 0.0
    %236 = vmatpush1.msra.mxu0 0.0
    %237 = vmatprep.subr.mxu0 0.0
    %238 = vmatpush1.msra.mxu0 0.0
    %239 = vmatprep.subr.mxu0 0.0
    %240 = vmatpush1.msra.mxu0 0.0
    %241 = vmatprep.subr.mxu0 0.0
    %242 = vmatpush1.msra.mxu0 0.0
    %243 = vmatprep.subr.mxu0 0.0
    %244 = vmatpush1.msra.mxu0 0.0
    %245 = vmatprep.subr.mxu0 0.0
    %246 = vmatpush1.msra.mxu0 0.0
    %247 = vmatprep.subr.mxu0 0.0
    %248 = vmatpush1.msra.mxu0 0.0
    %249 = vmatprep.subr.mxu0 0.0
    %250 = vmatpush1.msra.mxu0 0.0
    %251 = vmatprep.subr.mxu0 0.0
    %252 = vmatpush1.msra.mxu0 %v215
    %253 = vmatprep.subr.mxu0 0.0
    %254 = vmatpush1.msra.mxu0 %v214
    %255 = vmatprep.subr.mxu0 0.0
    %256 = vmatpush2.msra.mxu0 0.0
    %257 = vmatprep.subr.mxu0 0.0
    %258 = vmatpush2.msra.mxu0 0.0
    %259 = vmatprep.subr.mxu0 0.0
    %260 = vmatpush2.msra.mxu0 0.0
    %261 = vmatprep.subr.mxu0 0.0
    %262 = vmatpush2.msra.mxu0 0.0
    %263 = vmatprep.subr.mxu0 0.0
    %264 = vmatpush2.msra.mxu0 0.0
    %265 = vmatprep.subr.mxu0 0.0
    %266 = vmatpush2.msra.mxu0 0.0
    %267 = vmatprep.subr.mxu0 0.0
    %268 = vmatpush2.msra.mxu0 0.0
    %269 = vmatprep.subr.mxu0 0.0
    %270 = vmatpush2.msra.mxu0 0.0
    %271 = vmatprep.subr.mxu0 0.0
    %272 = vmatpush2.msra.mxu0 0.0
    %273 = vmatprep.subr.mxu0 0.0
    %274 = vmatpush2.msra.mxu0 0.0
    %275 = vmatprep.subr.mxu0 0.0
    %276 = vmatpush2.msra.mxu0 0.0
    %277 = vmatprep.subr.mxu0 0.0
    %278 = vmatpush2.msra.mxu0 0.0
    %279 = vmatprep.subr.mxu0 0.0
    %280 = vmatpush2.msra.mxu0 0.0
    %281 = vmatprep.subr.mxu0 0.0
    %282 = vmatpush2.msra.mxu0 0.0
    %283 = vmatprep.subr.mxu0 0.0
    %284 = vmatpush2.msra.mxu0 0.0
    %285 = vmatprep.subr.mxu0 0.0
    %286 = vmatpush2.msra.mxu0 0.0
    %287 = vmatprep.mubr.f32.mxu0 0.0
    %288 = vmatmul.mubr.f32.gmra.mxu0 %v221
    %v289 = vpop.f32.mrf.mxu0
    %v290 = vadd.f32 0.0, %v289
    %v291 = vpop.f32.mrf.mxu0
    %292 = vdwg.mxu0
    %293 = vadd.xlane.f32.xlu0 %v290
    %v294 = vpop.xlane.xlu0 %293
    %v295 = vmul.f32 %v294, 0.125
    %v296 = vmul.f32 %v290, %v290
    %297 = vadd.xlane.f32.xlu0 %v296
    %v298 = vpop.xlane.xlu0 %297
    %v299 = vmul.f32 %v298, 0.125
    %v300 = vmul.f32 %v295, %v295
    %v301 = vsub.f32 %v299, %v300
    %v302 = vmax.f32 %v301, 0.0
    %v303 = vsub.f32 %v290, %v295
    %v304 = vadd.f32 %v302, 1e-05
    %v305 = vrsqrt.pop %v304
    %v306 = vmul.f32 %v303, %v305
    %307 = vset.pattern.permute.xlu0 26
    %308 = vperm.xlu0 %307, %v41
    %v309 = vpop.permute.xlu0 %308
    %v311 = vmul.f32 %v306, %v309
    %312 = vset.pattern.permute.xlu0 27
    %313 = vperm.xlu0 %312, %v41
    %v314 = vpop.permute.xlu0 %313
    %v316 = vadd.f32 %v311, %v314
    %v317 = vmax.f32 %v316, 0.0
    %v318 = vmul.f32 %v317, %v47
    %v319 = vadd.f32 %v318, %v216
    %320 = vadd.xlane.f32.xlu0 %v319
    %v321 = vpop.xlane.xlu0 %320
    %v322 = vmul.f32 %v321, 0.125
    %v323 = vmul.f32 %v319, %v319
    %324 = vadd.xlane.f32.xlu0 %v323
    %v325 = vpop.xlane.xlu0 %324
    %v326 = vmul.f32 %v325, 0.125
    %v327 = vmul.f32 %v322, %v322
    %v328 = vsub.f32 %v326, %v327
    %v329 = vmax.f32 %v328, 0.0
    %v330 = vsub.f32 %v319, %v322
    %v331 = vadd.f32 %v329, 1e-05
    %v332 = vrsqrt.pop %v331
    %v333 = vmul.f32 %v330, %v332
    %334 = vset.pattern.permute.xlu0 28
    %335 = vperm.xlu0 %334, %v41
    %v336 = vpop.permute.xlu0 %335
    %v338 = vmul.f32 %v333, %v336
    %339 = vset.pattern.permute.xlu0 29
    %340 = vperm.xlu0 %339, %v41
    %v341 = vpop.permute.xlu0 %340
    %v343 = vadd.f32 %v338, %v341
    %344 = vset.pattern.permute.xlu0 30
    %345 = vperm.xlu0 %344, %v41
    %v346 = vpop.permute.xlu0 %345
    %v348 = vmul.f32 %v343, %v346
    %v349 = vrot.slane %v348, 4
    %v350 = vadd.f32 %v348, %v349
    %v351 = vrot.slane %v350, 2
    %v352 = vadd.f32 %v350, %v351
    %v353 = vrot.slane %v352, 1
    %v354 = vadd.f32 %v352, %v353
    %356 = vset.pattern.permute.xlu0 31
    %357 = vperm.xlu0 %356, %v42
    %v358 = vpop.permute.xlu0 %357
    %v360 = vadd.f32 %v354, %v358
    %v361 = vxor.u32 %v360, 2147483648
    %v362 = vmul.f32 %v361, 1.442695
    %v363 = vpow.pop %v362
    %v364 = vadd.f32 %v363, 1.0
    %v365 = vrcp.pop %v364
    %v366 = vmul.f32 1.0, %v365
    %367 = vst [vmem:[#allocation7] sm:$0x1] %v366
    // Predicated region
    $region18: #{tpu_custom_call.1} parent=1 // pred_check
      _
    $region19: #{tpu_custom_call.1} parent=1 // pred_check_branch
      %369 = sbr.rel (0) target = $region21
    $region20: #{tpu_custom_call.1} parent=1 // pred_region
      %s371 = ssub.s32 16, 16
      %372 = vsyncadd [#allocation4], %s371
      %s374 = sshll.u32 [#allocation7], 4
      %s375 = int_to_ptr.vmem [resolvable:$true] %s374
      %377 = dma.vmem_to_hbm [thread:$0]  %s375, 16, %s2, [#allocation4]
    $region21: #{tpu_custom_call.1} parent=1 // pred_fallthru
      _
    // Predicated region
    $region22: #{tpu_custom_call.1} parent=1 // pred_check
      _
    $region23: #{tpu_custom_call.1} parent=1 // pred_check_branch
      %379 = sbr.rel (0) target = $region25
    $region24: #{tpu_custom_call.1} parent=1 // pred_region
      %380 = dma.done [#allocation4], 16
    $region25: #{tpu_custom_call.1} parent=1 // pred_fallthru
      _
    %381 = vsyncpa [#allocation3], 1
    %382 = vsyncpa [#allocation6], 1
    %383 = vsyncpa [#allocation4], 1

</llo_original>
